<compile_context>
chip_gen: v5e
topology: v5e:2x2
jax: 0.10.0
libtpu: 0.0.40
codegen_flags: <defaults>
</compile_context>

<pallas_src>
import functools

import jax
import jax.numpy as jnp
from jax.experimental import pallas as pl
from jax.experimental.pallas import tpu as pltpu

_LANE = 128          # TPU vreg lane width
_SUBLANE = 8         # TPU vreg sublane count (32-bit)
_MIB = 1024 * 1024


def _round_up(x, m):
    return (x + m - 1) // m * m


def _target_buffer_bytes():
    """Target bytes for one x tile buffer, scaled by TPU generation.

    v5e/v6e (128 MiB VMEM) -> 8 MiB per buffer; v7x (64 MiB VMEM) -> 4 MiB.
    Large enough that the per-grid-step overhead (~0.35 us) is <10% of the tile
    DMA time even at v7x's ~3.2 TB/s HBM, while the double-buffered working set
    stays comfortably inside VMEM on every generation.
    """
    try:
        vmem = int(pltpu.get_tpu_info().vmem_capacity_bytes)
    except Exception:
        vmem = 128 * _MIB
    return int(min(8 * _MIB, max(2 * _MIB, vmem // 16)))


def _padded_block_bytes(rows, cols, itemsize):
    """VMEM footprint of one block (last dim padded to 128 lanes, rows to 8)."""
    return _round_up(max(int(rows), 1), _SUBLANE) * _round_up(max(int(cols), 1), _LANE) * int(itemsize)


def _vmem_limit_bytes(block_bytes):
    """Derive the scoped-VMEM limit from the actual tiles (double-buffered)."""
    total = sum(2 * int(b) for b in block_bytes) + 2 * _MIB   # + Mosaic headroom
    try:
        cap = int(pltpu.get_tpu_info().vmem_capacity_bytes) // 2
    except Exception:
        cap = 48 * _MIB
    return int(min(max(total, 4 * _MIB), cap))


def _fast_kernel(w_ref, x_ref, o_ref, *, feat, groups):
    """Fast path: feat (= D) divides 128, groups = 128 // feat.

    w_ref : (1, 128)   raw weight tiled `groups` times along the lane axis
    x_ref : (TR, 128)  zero-copy row-major view of x; each 128-lane row holds
                       `groups` consecutive x rows, feature index = lane % feat
    o_ref : (TR, groups)
    """
    # Stable softmax on the lane-tiled weight.  All `groups` copies are
    # identical, so the 128-lane sum is exactly `groups` * (softmax denom).
    w = w_ref[...].astype(jnp.float32)
    m = jnp.max(w, axis=-1, keepdims=True)
    e = jnp.exp(w - m)
    denom128 = jnp.sum(e, axis=-1, keepdims=True)
    w_norm = e * (groups / denom128)              # == softmax(weight)[lane % feat]

    # Weighted grouped reduction, f32 accumulation.  Each group's reduction is
    # strictly within its own 128-lane row, so garbage rows in a padded partial
    # block never contaminate valid output rows.
    xw = x_ref[...].astype(jnp.float32) * w_norm  # (TR, 128), VPU
    parts = [
        jnp.sum(xw[:, g * feat:(g + 1) * feat], axis=-1, keepdims=True)  # (TR, 1)
        for g in range(groups)
    ]
    acc = parts[0] if groups == 1 else jnp.concatenate(parts, axis=-1)   # (TR, G)
    o_ref[...] = acc.astype(o_ref.dtype)


def _rowmajor_kernel(w_ref, x_ref, o_ref):
    """General path (any D): row-major (TN, D) blocks, features on lanes.

    w_ref: (1, D), x_ref: (TN, D), o_ref: (TN, 1).
    """
    w = w_ref[...].astype(jnp.float32)
    m = jnp.max(w, axis=-1, keepdims=True)
    e = jnp.exp(w - m)
    w_norm = e / jnp.sum(e, axis=-1, keepdims=True)
    acc = jnp.sum(x_ref[...].astype(jnp.float32) * w_norm, axis=-1, keepdims=True)
    o_ref[...] = acc.astype(o_ref.dtype)


def my_linear(x, weight, *, block_rows=None):
    """Pallas TPU implementation of MyLinear.forward.

    x: (..., D), weight: (D,)  ->  (...,) with out = x @ softmax(weight).
    block_rows: optional row-tile override (testing multi-step grids at small N).
    """
    D = x.shape[-1]
    assert weight.shape == (D,), (weight.shape, D)
    lead = x.shape[:-1]
    n_rows = 1
    for dim in lead:
        n_rows *= dim
    out_dtype = x.dtype
    itemsize = x.dtype.itemsize
    x2d = x.reshape(n_rows, D)                      # zero-copy (row-major)
    target = _target_buffer_bytes()

    if 128 % D == 0 and D >= _SUBLANE:
        # -------- fast path: zero-copy (R, 128) view, lane-dense loads --------
        # (D >= 8 keeps the unrolled group count G = 128//D <= 16.)
        G = _LANE // D
        n_main = (n_rows // G) * G                  # rows covered by full view rows
        r = n_main // G                             # = n_main * D // 128
        chunks = []
        if r > 0:
            xv = x2d[:n_main].reshape(r, _LANE)     # zero-copy bitcast view
            if block_rows is None:
                tr = max(_SUBLANE,
                         (target // (_LANE * itemsize)) // _SUBLANE * _SUBLANE)
            else:
                tr = max(_SUBLANE, _round_up(int(block_rows), _SUBLANE))
            if tr >= r:
                tr = r                              # single block == full array
            # Raw weight, tiled along lanes so lane l carries weight[l % D].
            w_lane = jnp.tile(weight, G).reshape(1, _LANE)   # O(128) wrapper op

            vmem_limit = _vmem_limit_bytes([
                _padded_block_bytes(tr, _LANE, itemsize),          # x tile
                _padded_block_bytes(tr, G, jnp.dtype(out_dtype).itemsize),  # out
                _padded_block_bytes(1, _LANE, weight.dtype.itemsize),       # weight
            ])
            kernel = functools.partial(_fast_kernel, feat=D, groups=G)
            out = pl.pallas_call(
                kernel,
                out_shape=jax.ShapeDtypeStruct((r, G), out_dtype),
                grid=(pl.cdiv(r, tr),),
                in_specs=[
                    # weight: same block every step -> stays resident in VMEM.
                    pl.BlockSpec((1, _LANE), lambda i: (0, 0)),
                    # x view: one lane-dense (TR, 128) tile per step (pipelined;
                    # partial tail block handled by Pallas, no HBM pad).
                    pl.BlockSpec((tr, _LANE), lambda i: (i, 0)),
                ],
                out_specs=pl.BlockSpec((tr, G), lambda i: (i, 0)),
                compiler_params=pltpu.CompilerParams(
                    # Independent row tiles: shard across both TCs on v7x.
                    dimension_semantics=("parallel",),
                    vmem_limit_bytes=vmem_limit,
                ),
            )(w_lane, xv)
            chunks.append(out.reshape(n_main))      # zero-copy (R, G) -> (N_main,)

        if n_main < n_rows:
            # Sub-row remainder (< 128/D rows): trivial jnp epilogue with the
            # same stable softmax + f32 accumulation.
            w_norm = jax.nn.softmax(weight.astype(jnp.float32))
            tail = (x2d[n_main:].astype(jnp.float32) @ w_norm).astype(out_dtype)
            chunks.append(tail)

        flat = chunks[0] if len(chunks) == 1 else jnp.concatenate(chunks, axis=0)
        return flat.reshape(lead)

    # ------------- general path: D does not divide 128 (or D < 8) -------------
    d_pad = _round_up(D, _LANE)
    if _SUBLANE * d_pad * itemsize > 16 * _MIB:
        # TODO(synk): add a D-reduction ("arbitrary") grid axis with an f32
        # scratch accumulator for very large input_dim; fall back to XLA rather
        # than risk a VMEM compile failure here.
        w_norm = jax.nn.softmax(weight.astype(jnp.float32))
        return (x2d.astype(jnp.float32) @ w_norm).astype(out_dtype).reshape(lead)

    if block_rows is None:
        tn = max(_SUBLANE, (target // (d_pad * itemsize)) // _SUBLANE * _SUBLANE)
    else:
        tn = max(_SUBLANE, _round_up(int(block_rows), _SUBLANE))
    if tn >= n_rows:
        tn = n_rows
    vmem_limit = _vmem_limit_bytes([
        _padded_block_bytes(tn, D, itemsize),
        _padded_block_bytes(tn, 1, jnp.dtype(out_dtype).itemsize),
        _padded_block_bytes(1, D, weight.dtype.itemsize),
    ])
    out = pl.pallas_call(
        _rowmajor_kernel,
        out_shape=jax.ShapeDtypeStruct((n_rows, 1), out_dtype),
        grid=(pl.cdiv(n_rows, tn),),
        in_specs=[
            pl.BlockSpec((1, D), lambda i: (0, 0)),
            pl.BlockSpec((tn, D), lambda i: (i, 0)),
        ],
        out_specs=pl.BlockSpec((tn, 1), lambda i: (i, 0)),
        compiler_params=pltpu.CompilerParams(
            dimension_semantics=("parallel",),
            vmem_limit_bytes=vmem_limit,
        ),
    )(weight.reshape(1, D), x2d)
    return out.reshape(lead)


if __name__ == "__main__":
    key = jax.random.PRNGKey(0)
    k1, k2, k3, k4, k5 = jax.random.split(key, 5)

    # Shapes implied by the module: x = (batch, input_dim), weight = (input_dim,)
    input_dim = 32
    batch = 64

    # Deterministic parameter init exactly as in the module: ones / input_dim.
    weight = jnp.ones((input_dim,), dtype=jnp.float32) / input_dim
    x = jax.random.normal(k1, (batch, input_dim), dtype=jnp.float32)
    y = my_linear(x, weight)
    jax.block_until_ready(y)
    y_ref = x @ jax.nn.softmax(weight)
    assert y.shape == (batch,), y.shape
    assert jnp.allclose(y, y_ref, atol=1e-5, rtol=1e-5)

    # Non-trivial softmax, 3-D leading dims, multi-step grid with a partial
    # last block (view rows R = 75, block_rows=16 -> grid of 5).
    weight2 = jax.random.normal(k2, (input_dim,), dtype=jnp.float32)
    x2 = jax.random.normal(k3, (5, 60, input_dim), dtype=jnp.float32)
    y2 = my_linear(x2, weight2, block_rows=16)
    jax.block_until_ready(y2)
    assert y2.shape == (5, 60), y2.shape
    assert jnp.allclose(y2, x2 @ jax.nn.softmax(weight2), atol=1e-5, rtol=1e-5)

    # Ragged N (N % (128//D) != 0): kernel for the main rows + tiny jnp tail.
    x3 = jax.random.normal(k4, (7, 33, input_dim), dtype=jnp.float32)
    y3 = my_linear(x3, weight2)
    jax.block_until_ready(y3)
    assert y3.shape == (7, 33), y3.shape
    assert jnp.allclose(y3, x3 @ jax.nn.softmax(weight2), atol=1e-5, rtol=1e-5)

    # General path: input_dim that does not divide 128.
    d4 = 24
    weight4 = jax.random.normal(k5, (d4,), dtype=jnp.float32)
    x4 = jax.random.normal(k1, (37, d4), dtype=jnp.float32)
    y4 = my_linear(x4, weight4)
    jax.block_until_ready(y4)
    assert y4.shape == (37,), y4.shape
    assert jnp.allclose(y4, x4 @ jax.nn.softmax(weight4), atol=1e-5, rtol=1e-5)

    # bf16 activations (halves HBM traffic; f32 accumulation in-kernel).
    xb = x2.astype(jnp.bfloat16)
    yb = my_linear(xb, weight2)
    jax.block_until_ready(yb)
    ref_b = (xb.astype(jnp.float32) @ jax.nn.softmax(weight2)).astype(jnp.bfloat16)
    assert yb.dtype == jnp.bfloat16 and yb.shape == (5, 60)
    assert jnp.allclose(yb.astype(jnp.float32), ref_b.astype(jnp.float32),
                        atol=5e-2, rtol=5e-2)

    print("KERNEL_OK")
</pallas_src>

<mosaic_0001>
module attributes {stable_mosaic.version = 11 : i64} {
  func.func @_fast_kernel(%arg0: i32, %arg1: memref<1x128xf32, #tpu.memory_space<vmem>>, %arg2: memref<16x128xf32, #tpu.memory_space<vmem>>, %arg3: memref<16x4xf32, #tpu.memory_space<vmem>>) attributes {dimension_semantics = [#tpu.dimension_semantics<parallel>], iteration_bounds = array<i64: 1>, scalar_prefetch = 0 : i64, scratch_operands = 0 : i64, tpu.core_type = #tpu.core_type<tc>, window_params = [{pipeline_mode = #tpu.pipeline_mode<synchronous>, transform_indices = @transform_0, window_bounds = array<i64: 1, 128>}, {transform_indices = @transform_1, window_bounds = array<i64: 16, 128>}, {transform_indices = @transform_2, window_bounds = array<i64: 16, 4>}]} {
    %c0 = arith.constant 0 : index
    %c0_0 = arith.constant 0 : index
    %0 = vector.load %arg1[%c0, %c0_0] : memref<1x128xf32, #tpu.memory_space<vmem>>, vector<1x128xf32>
    %cst = arith.constant dense<0xFF800000> : vector<1xf32>
    %1 = vector.multi_reduction <maximumf>, %0, %cst [1] : vector<1x128xf32> to vector<1xf32>
    %2 = vector.shape_cast %1 : vector<1xf32> to vector<1x1xf32>
    %3 = vector.broadcast %2 : vector<1x1xf32> to vector<1x128xf32>
    %4 = arith.subf %0, %3 : vector<1x128xf32>
    %5 = math.exp %4 : vector<1x128xf32>
    %cst_1 = arith.constant dense<0.000000e+00> : vector<1xf32>
    %6 = vector.multi_reduction <add>, %5, %cst_1 [1] : vector<1x128xf32> to vector<1xf32>
    %7 = vector.shape_cast %6 : vector<1xf32> to vector<1x1xf32>
    %cst_2 = arith.constant 4.000000e+00 : f32
    %8 = vector.broadcast %cst_2 : f32 to vector<1x1xf32>
    %9 = arith.divf %8, %7 : vector<1x1xf32>
    %10 = vector.broadcast %9 : vector<1x1xf32> to vector<1x128xf32>
    %11 = arith.mulf %5, %10 : vector<1x128xf32>
    %c0_3 = arith.constant 0 : index
    %c0_4 = arith.constant 0 : index
    %12 = vector.load %arg2[%c0_3, %c0_4] : memref<16x128xf32, #tpu.memory_space<vmem>>, vector<16x128xf32>
    %13 = vector.broadcast %11 : vector<1x128xf32> to vector<16x128xf32>
    %14 = arith.mulf %12, %13 : vector<16x128xf32>
    %15 = vector.extract_strided_slice %14 {offsets = [0, 0], sizes = [16, 32], strides = [1, 1]} : vector<16x128xf32> to vector<16x32xf32>
    %cst_5 = arith.constant dense<0.000000e+00> : vector<16xf32>
    %16 = vector.multi_reduction <add>, %15, %cst_5 [1] : vector<16x32xf32> to vector<16xf32>
    %17 = vector.shape_cast %16 : vector<16xf32> to vector<16x1xf32>
    %18 = vector.extract_strided_slice %14 {offsets = [0, 32], sizes = [16, 32], strides = [1, 1]} : vector<16x128xf32> to vector<16x32xf32>
    %cst_6 = arith.constant dense<0.000000e+00> : vector<16xf32>
    %19 = vector.multi_reduction <add>, %18, %cst_6 [1] : vector<16x32xf32> to vector<16xf32>
    %20 = vector.shape_cast %19 : vector<16xf32> to vector<16x1xf32>
    %21 = vector.extract_strided_slice %14 {offsets = [0, 64], sizes = [16, 32], strides = [1, 1]} : vector<16x128xf32> to vector<16x32xf32>
    %cst_7 = arith.constant dense<0.000000e+00> : vector<16xf32>
    %22 = vector.multi_reduction <add>, %21, %cst_7 [1] : vector<16x32xf32> to vector<16xf32>
    %23 = vector.shape_cast %22 : vector<16xf32> to vector<16x1xf32>
    %24 = vector.extract_strided_slice %14 {offsets = [0, 96], sizes = [16, 32], strides = [1, 1]} : vector<16x128xf32> to vector<16x32xf32>
    %cst_8 = arith.constant dense<0.000000e+00> : vector<16xf32>
    %25 = vector.multi_reduction <add>, %24, %cst_8 [1] : vector<16x32xf32> to vector<16xf32>
    %26 = vector.shape_cast %25 : vector<16xf32> to vector<16x1xf32>
    %27 = tpu.concatenate %17, %20, %23, %26 in 1 : vector<16x1xf32>, vector<16x1xf32>, vector<16x1xf32>, vector<16x1xf32> -> vector<16x4xf32>
    %c0_9 = arith.constant 0 : index
    %c0_10 = arith.constant 0 : index
    %28 = vector.load %arg3[%c0_9, %c0_10] : memref<16x4xf32, #tpu.memory_space<vmem>>, vector<16x4xf32>
    tpu.vector_store %arg3[%c0_9, %c0_10], %27 {strides = array<i32>} : memref<16x4xf32, #tpu.memory_space<vmem>>, vector<16x4xf32>,
    return
  }
  func.func @transform_0(%arg0: i32) -> (i32, i32) {
    %c0_i32 = arith.constant 0 : i32
    %c0_i32_0 = arith.constant 0 : i32
    %c0_i32_1 = arith.constant 0 : i32
    return %c0_i32, %c0_i32_0 : i32, i32
  }
  func.func @transform_1(%arg0: i32) -> (i32, i32) {
    %c0_i32 = arith.constant 0 : i32
    %c0_i32_0 = arith.constant 0 : i32
    return %arg0, %c0_i32 : i32, i32
  }
  func.func @transform_2(%arg0: i32) -> (i32, i32) {
    %c0_i32 = arith.constant 0 : i32
    %c0_i32_0 = arith.constant 0 : i32
    return %arg0, %c0_i32 : i32, i32
  }
}

</mosaic_0001>

<llo_original>
// kernel: tpu_custom_call.1
$region0: #{tpu_custom_call.1}
  #allocation0 [shape = 'u32[]', space=smem, size = 0x4, offset = 0x4, fixed_abs, tag = 'smem constant byte address 0x4 - core index']
  #allocation1 [shape = 'u32[72,128]{1,0:T(1,128)}', space=vmem, size = 0x9000, scoped, tag = 'internal scratch']
  %s0 = inlined_call_operand.hbm [shape: f32[1,128], index: 0, kind: input, shape index: {}]
  %s1 = inlined_call_operand.hbm [shape: f32[16,128], index: 1, kind: input, shape index: {}]
  %s2 = inlined_call_operand.vmem [shape: f32[16,4], index: 2, kind: output, shape index: {}]
  %s3 = sld [smem:[#allocation0]]
  $region26: #{tpu_custom_call.1} parent=0
    _
  %s5 = ssub.s32 1, %s3
  %s6 = scalar_select 0, %s5, %s3
  $region1: #{tpu_custom_call.1} parent=0
    #allocation2 [shape = 'u8[512]{0}', space=vmem, size = 0x400, scoped, tag = 'input window, operand 0, single buffered']
    #allocation3 [shape = 's32[1]{0}', space=sflag, size = 0x4, scoped, tag = 'scoped memory for tpu_custom_call.1']
    #allocation4 [shape = 'u8[8192]{0}', space=vmem, size = 0x2000, scoped, tag = 'input window, operand 1, single buffered']
    #allocation5 [shape = 's32[1]{0}', space=sflag, size = 0x4, scoped, tag = 'scoped memory for tpu_custom_call.1']
    %7 = vsyncpa [#allocation3], 0
    %8 = vsyncpa [#allocation5], 0
    // Predicated region
    $region2: #{tpu_custom_call.1} parent=1 // pred_check
      _
    $region3: #{tpu_custom_call.1} parent=1 // pred_check_branch
      %10 = sbr.rel (0) target = $region5
    $region4: #{tpu_custom_call.1} parent=1 // pred_region
      %12 = vsyncadd [#allocation3], 0
      %s14 = sshll.u32 %s0, 4
      %s15 = int_to_ptr.hbm [resolvable:$true] %s14
      %s16 = sshll.u32 [#allocation2], 4
      %s17 = int_to_ptr.vmem [resolvable:$true] %s16
      %19 = dma.hbm_to_vmem [thread:$0]  %s15, 16, %s17, [#allocation3]
    $region5: #{tpu_custom_call.1} parent=1 // pred_fallthru
      _
    // Predicated region
    $region6: #{tpu_custom_call.1} parent=1 // pred_check
      _
    $region7: #{tpu_custom_call.1} parent=1 // pred_check_branch
      %21 = sbr.rel (0) target = $region9
    $region8: #{tpu_custom_call.1} parent=1 // pred_region
      %23 = vsyncadd [#allocation5], 0
      %s24 = sshll.u32 %s1, 4
      %s25 = int_to_ptr.hbm [resolvable:$true] %s24
      %s26 = sshll.u32 [#allocation4], 4
      %s27 = int_to_ptr.vmem [resolvable:$true] %s26
      %32 = dma.hbm_to_vmem [thread:$0]  %s25, 256, %s27, [#allocation5], 128, 128, 8
    $region9: #{tpu_custom_call.1} parent=1 // pred_fallthru
      _
    // Predicated region
    $region10: #{tpu_custom_call.1} parent=1 // pred_check
      _
    $region11: #{tpu_custom_call.1} parent=1 // pred_check_branch
      %34 = sbr.rel (0) target = $region13
    $region12: #{tpu_custom_call.1} parent=1 // pred_region
      %36 = dma.done [#allocation3], 16
    $region13: #{tpu_custom_call.1} parent=1 // pred_fallthru
      _
    // Predicated region
    $region14: #{tpu_custom_call.1} parent=1 // pred_check
      _
    $region15: #{tpu_custom_call.1} parent=1 // pred_check_branch
      %38 = sbr.rel (0) target = $region17
    $region16: #{tpu_custom_call.1} parent=1 // pred_region
      %40 = dma.done [#allocation5], 256
    $region17: #{tpu_custom_call.1} parent=1 // pred_fallthru
      _
    %v41 = vld [vmem:[#allocation2] sm:$0x1]
    %vm42 = vcmask 1040384
    %v43 = vsel %vm42, %v41, -inf
    %44 = vmax.xlane.f32.xlu0 %v43
    %v45 = vpop.xlane.xlu0 %44
    %v46 = vsub.f32 %v41, %v45
    %v47 = vmul.f32 %v46, 1.442695
    %v48 = vpow.pop %v47
    %v49 = vsel %vm42, %v48, 0.0
    %50 = vadd.xlane.f32.xlu0 %v49
    %v51 = vpop.xlane.xlu0 %50
    %v52 = vrcp.pop %v51
    %v53 = vmul.f32 %v51, %v52
    %v54 = vsub.f32 1.0, %v53
    %v55 = vmul.f32 %v52, %v54
    %v56 = vadd.f32 %v52, %v55
    %vm57 = vweird.f32 %v51
    %vm58 = vweird.f32 %v52
    %vm59 = vmor %vm57, %vm58
    %v60 = vsel %vm59, %v52, %v56
    %v61 = vand.u32 2147483647, %v51
    %vm62 = vcmp.eq.f32.partialorder %v61, 8.507059e+37
    %v63 = vand.u32 %v51, 2147483648
    %v64 = vor.u32 1.1754944e-38, %v63
    %v65 = vsel %vm62, %v64, %v60
    %v66 = vmul.f32 4.0, %v65
    %v67 = vmul.f32 %v48, %v66
    %v68 = vld [vmem:[#allocation4] sm:$0xff]
    %v69 = vld [vmem:[#allocation4 + $0x8] sm:$0xff]
    %v71 = vperm.slane %v67, 0
    %v73 = vmul.f32 %v68, %v71
    %v74 = vmul.f32 %v69, %v71
    %vm75 = vcmask 261120
    %v76 = vsel %vm75, %v73, 0.0
    %77 = vadd.xlane.f32.xlu0 %v76
    %v78 = vpop.xlane.xlu0 %77
    %v79 = vsel %vm75, %v74, 0.0
    %80 = vadd.xlane.f32.xlu0 %v79
    %v81 = vpop.xlane.xlu0 %80
    %84 = vrot.lane.b32.xlu0 %v73, 96
    %v85 = vpop.permute.xlu0 %84
    %86 = vrot.lane.b32.xlu0 %v74, 96
    %v87 = vpop.permute.xlu0 %86
    %v90 = vsel %vm75, %v85, 0.0
    %91 = vadd.xlane.f32.xlu0 %v90
    %v92 = vpop.xlane.xlu0 %91
    %v93 = vsel %vm75, %v87, 0.0
    %94 = vadd.xlane.f32.xlu0 %v93
    %v95 = vpop.xlane.xlu0 %94
    %96 = vrot.lane.b32.xlu0 %v73, 64
    %v97 = vpop.permute.xlu0 %96
    %98 = vrot.lane.b32.xlu0 %v74, 64
    %v99 = vpop.permute.xlu0 %98
    %v102 = vsel %vm75, %v97, 0.0
    %103 = vadd.xlane.f32.xlu0 %v102
    %v104 = vpop.xlane.xlu0 %103
    %v105 = vsel %vm75, %v99, 0.0
    %106 = vadd.xlane.f32.xlu0 %v105
    %v107 = vpop.xlane.xlu0 %106
    %108 = vrot.lane.b32.xlu0 %v73, 32
    %v109 = vpop.permute.xlu0 %108
    %110 = vrot.lane.b32.xlu0 %v74, 32
    %v111 = vpop.permute.xlu0 %110
    %v114 = vsel %vm75, %v109, 0.0
    %115 = vadd.xlane.f32.xlu0 %v114
    %v116 = vpop.xlane.xlu0 %115
    %v117 = vsel %vm75, %v111, 0.0
    %118 = vadd.xlane.f32.xlu0 %v117
    %v119 = vpop.xlane.xlu0 %118
    %vm120 = vcmask 7168
    %v121 = vsel %vm120, %v78, %v92
    %v122 = vsel %vm120, %v81, %v95
    %vm123 = vcmask 15360
    %v124 = vsel %vm123, %v121, %v104
    %v125 = vsel %vm123, %v122, %v107
    %vm126 = vcmask 23552
    %v127 = vsel %vm126, %v124, %v116
    %v128 = vsel %vm126, %v125, %v119
    %vm129 = vcmask 31744
    %130 = vst.msk [vmem:[%s2] sm:$0xff] %vm129, %v127
    %131 = vst.msk [vmem:[%s2 + $0x8] sm:$0xff] %vm129, %v128
    // Predicated region
    $region18: #{tpu_custom_call.1} parent=1 // pred_check
      _
    $region19: #{tpu_custom_call.1} parent=1 // pred_check_branch
      %133 = sbr.rel (0) target = $region21
    $region20: #{tpu_custom_call.1} parent=1 // pred_region
      _
    $region21: #{tpu_custom_call.1} parent=1 // pred_fallthru
      _
    // Predicated region
    $region22: #{tpu_custom_call.1} parent=1 // pred_check
      _
    $region23: #{tpu_custom_call.1} parent=1 // pred_check_branch
      %135 = sbr.rel (0) target = $region25
    $region24: #{tpu_custom_call.1} parent=1 // pred_region
      _
    $region25: #{tpu_custom_call.1} parent=1 // pred_fallthru
      _
    %136 = vsyncpa [#allocation3], 1
    %137 = vsyncpa [#allocation5], 1

</llo_original>
